<compile_context>
chip_gen: v6e
topology: v6e:2x2x1
jax: 0.10.0
libtpu: 0.0.40
codegen_flags: <defaults>
</compile_context>

<pallas_src>
import jax
import jax.numpy as jnp
from jax.experimental import pallas as pl
from jax.experimental.pallas import tpu as pltpu


def _identity_dma_kernel(x_ref, o_ref):
    # Whole-array HBM -> HBM copy via the DMA engine. No VMEM staging, no
    # vld/vst slot usage; streams at full HBM bandwidth.
    def body(sem):
        cp = pltpu.make_async_copy(x_ref, o_ref, sem)
        cp.start()
        cp.wait()

    pl.run_scoped(body, pltpu.SemaphoreType.DMA(()))


def module_wrapper_forward(x, *, materialize_copy=False):
    """Pallas implementation of ModuleWrapper.forward: returns (x, kl).

    The children() loop is empty and no module defines kl_loss(), so the
    forward is a pure identity with kl == 0.0. By default we return x without
    launching any kernel (free). Set materialize_copy=True only when a fresh
    output buffer is genuinely required; that path uses a single HBM->HBM DMA.
    """
    kl = jnp.zeros((), jnp.float32)

    if not materialize_copy or x.size == 0:
        # Fast path (review's primary optimization): nothing a copy kernel
        # does can beat returning the input unchanged.
        return x, kl

    out = pl.pallas_call(
        _identity_dma_kernel,
        out_shape=jax.ShapeDtypeStruct(x.shape, x.dtype),
        in_specs=[pl.BlockSpec(memory_space=pl.ANY)],
        out_specs=pl.BlockSpec(memory_space=pl.ANY),
        cost_estimate=pl.CostEstimate(
            flops=0,
            transcendentals=0,
            bytes_accessed=2 * x.size * x.dtype.itemsize,
        ),
    )(x)

    return out, kl


if __name__ == "__main__":
    key = jax.random.PRNGKey(0)
    # Small NCHW input consistent with a conv-style wrapper: batch=2, C=4, H=W=16.
    x = jax.random.normal(key, (2, 4, 16, 16), dtype=jnp.float32)

    # Default (identity, no kernel) path — the actual forward semantics.
    out_fast, kl_fast = module_wrapper_forward(x)
    out_fast = jax.block_until_ready(out_fast)
    kl_fast = jax.block_until_ready(kl_fast)

    # Kernel path (explicit materialized copy) — run once to exercise Pallas.
    out_copy, kl_copy = module_wrapper_forward(x, materialize_copy=True)
    out_copy = jax.block_until_ready(out_copy)
    kl_copy = jax.block_until_ready(kl_copy)

    # Sanity checks: identity output and zero KL on both paths.
    assert out_fast.shape == x.shape and out_fast.dtype == x.dtype
    assert out_copy.shape == x.shape and out_copy.dtype == x.dtype
    assert bool(jnp.all(out_fast == x))
    assert bool(jnp.all(out_copy == x))
    assert float(kl_fast) == 0.0
    assert float(kl_copy) == 0.0

    print("KERNEL_OK")
</pallas_src>

<mosaic_0001>
module attributes {stable_mosaic.version = 11 : i64} {
  func.func @_identity_dma_kernel(%arg0: memref<2x4x16x16xf32, #tpu.memory_space<any>>, %arg1: memref<2x4x16x16xf32, #tpu.memory_space<any>>) attributes {dimension_semantics = [], scalar_prefetch = 0 : i64, scratch_operands = 0 : i64, tpu.core_type = #tpu.core_type<tc>} {
    "tpu.region"() ({
      %0 = tpu.sem_alloc : memref<!tpu.dma_semaphore, #tpu.memory_space<semaphore_mem>>
      tpu.enqueue_dma source(%arg0 : memref<2x4x16x16xf32, #tpu.memory_space<any>>) target(%arg1 : memref<2x4x16x16xf32, #tpu.memory_space<any>>) target_semaphore(%0 : memref<!tpu.dma_semaphore, #tpu.memory_space<semaphore_mem>>)
      tpu.wait_dma2 semaphore(%0 : memref<!tpu.dma_semaphore, #tpu.memory_space<semaphore_mem>>) src(%arg0 : memref<2x4x16x16xf32, #tpu.memory_space<any>>) dst(%arg1 : memref<2x4x16x16xf32, #tpu.memory_space<any>>)
      tpu.yield
    }) : () -> ()
    return
  }
}

</mosaic_0001>

<llo_original>
// kernel: tpu_custom_call.1
$region0: #{tpu_custom_call.1}
  #allocation0 [shape = 'u32[]', space=smem, size = 0x4, offset = 0x4, fixed_abs, tag = 'smem constant byte address 0x4 - core index']
  #allocation1 [shape = 'u32[144,128]{1,0:T(1,128)}', space=vmem, size = 0x12000, scoped, tag = 'internal scratch']
  #allocation3 [shape = 's32[]', space=sflag, size = 0x4, offset = 0, fixed_abs, tag = 'sflag constant byte address 0x0 - dummy sync flag']
  #allocation4 [shape = 'u32[0]{0}', space=smem, size = 0, offset = 0, fixed_abs, tag = 'smem constant byte address 0x0 - null']
  %s0 = inlined_call_operand.hbm [shape: f32[2,4,16,16], index: 0, kind: input, shape index: {}]
  %s1 = inlined_call_operand.hbm [shape: f32[2,4,16,16], index: 1, kind: output, shape index: {}]
  %s2 = sld [smem:[#allocation0]]
  $region3: #{tpu_custom_call.1} parent=0
    _
  %s4 = ssub.s32 1, %s2
  %s5 = scalar_select 0, %s4, %s2
  $region2: #{tpu_custom_call.1} parent=0
    #allocation2 [shape = 's32[1]{0}', space=sflag, size = 0x4, scoped, tag = 'scoped memory for tpu_custom_call.1']
    %s7 = sshll.u32 1, 14
    %s8 = sxor.u32 4294967295, %s7
    %12 = dma.general %s0, 2048, %s1, [#allocation2], 131072, [#allocation4], 0, 0
    %s13 = smul.u32 2, 4
    %s14 = smul.u32 %s13, 16
    %s15 = smul.u32 %s14, 1
    %s16 = sshll.u32 %s15, 4
    %17 = dma.done [#allocation2], %s16

</llo_original>
